<compile_context>
chip_gen: v7x
topology: tpu7x:2x2x1
jax: 0.10.0
libtpu: 0.0.40
codegen_flags: <defaults>
</compile_context>

<pallas_src>
import functools

import jax
import jax.numpy as jnp
from jax import lax
from jax.experimental import pallas as pl
from jax.experimental.pallas import tpu as pltpu

K1, P1 = 11, 5     # first conv: kernel_size=11, padding=5
K2, P2 = 7, 3      # second conv: kernel_size=7, padding=3
NEG_SLOPE = 0.01   # nn.LeakyReLU default
EPS = 1e-5         # nn.BatchNorm1d default


def _round_up(x, m):
    return (x + m - 1) // m * m


def _pick_samples_per_tile(n, lg, max_lanes=2048):
    """Largest divisor of n with tb*lg <= max_lanes (at least 1 sample/tile)."""
    tb = max(1, min(n, max_lanes // max(lg, 1)))
    while n % tb:
        tb -= 1
    return tb


# ---------------------------------------------------------------------------
# Pass A: conv1 on the gapped slab + per-tile BN1 partial sums.
# ---------------------------------------------------------------------------
def _conv_stats_kernel(x_ref, w_ref, mask_ref, h_ref, stats_ref, *, K, P):
    # x_ref    : (Cin, T)        compute_dtype  -- gapped activation slab tile
    # w_ref    : (K, Cmid, Cin)  compute_dtype  -- per-tap conv weights
    # mask_ref : (1, T)          float32        -- 1.0 on valid columns, 0.0 on gaps
    # h_ref    : (Cmid, T)       compute_dtype  -- pre-BN conv output tile
    # stats_ref: (1, Cmid, 2)    float32        -- per-tile [sum, sum_sq]
    x = x_ref[...]
    T = x.shape[-1]
    c_out = w_ref.shape[1]

    acc = jnp.zeros((c_out, T), jnp.float32)
    for k in range(K):
        # Column j of the rolled slab holds x[:, j + (k - P)]; gaps supply the
        # conv zero-padding, so valid output columns never read across samples.
        xs = pltpu.roll(x, (P - k) % T, 1)
        acc = acc + jnp.dot(w_ref[k], xs, preferred_element_type=jnp.float32)

    h = acc * mask_ref[...]                       # zero the gap columns
    h_ref[...] = h.astype(h_ref.dtype)
    s1 = jnp.sum(h, axis=1, keepdims=True)        # (Cmid, 1)
    s2 = jnp.sum(h * h, axis=1, keepdims=True)
    stats_ref[0] = jnp.concatenate([s1, s2], axis=1)


# ---------------------------------------------------------------------------
# Pass B: BN1 normalize + LeakyReLU + conv2 + per-tile BN2 partial sums.
# ---------------------------------------------------------------------------
def _bn_conv_stats_kernel(h_ref, mask_ref, a_ref, c_ref, w_ref, y_ref, stats_ref,
                          *, K, P, mxu_dtype):
    # h_ref : (Cmid, T)  compute_dtype ; a_ref/c_ref : (Cmid, 1) f32 (folded BN1)
    # w_ref : (K, Cout, Cmid) compute_dtype ; y_ref : (Cout, T) compute_dtype
    m = mask_ref[...]
    h = h_ref[...].astype(jnp.float32)
    hn = h * a_ref[...] + c_ref[...]                         # BN1 (affine-folded)
    hn = jnp.where(hn >= 0, hn, NEG_SLOPE * hn)              # LeakyReLU
    hn = (hn * m).astype(mxu_dtype)                          # re-zero gaps = conv2 pad

    T = hn.shape[-1]
    c_out = w_ref.shape[1]
    acc = jnp.zeros((c_out, T), jnp.float32)
    for k in range(K):
        hs = pltpu.roll(hn, (P - k) % T, 1)
        acc = acc + jnp.dot(w_ref[k], hs, preferred_element_type=jnp.float32)

    y = acc * m
    y_ref[...] = y.astype(y_ref.dtype)
    s1 = jnp.sum(y, axis=1, keepdims=True)                   # (Cout, 1)
    s2 = jnp.sum(y * y, axis=1, keepdims=True)
    stats_ref[0] = jnp.concatenate([s1, s2], axis=1)


# ---------------------------------------------------------------------------
# Pass C: BN2 normalize + LeakyReLU (elementwise, lane-dense).
# ---------------------------------------------------------------------------
def _bn_act_kernel(y_ref, a_ref, c_ref, o_ref):
    y = y_ref[...].astype(jnp.float32)
    y = y * a_ref[...] + c_ref[...]
    o_ref[...] = jnp.where(y >= 0, y, NEG_SLOPE * y)


def _bn_fold(stats, gamma, beta, count):
    """Combine per-tile [sum, sum_sq] -> BN scale/shift (a, c): y = a*x + c."""
    s = stats.sum(axis=0)                                    # (C, 2) f32
    mean = s[:, 0] / count
    var = jnp.maximum(s[:, 1] / count - mean * mean, 0.0)    # one-pass, clamped
    inv = gamma.astype(jnp.float32) * lax.rsqrt(var + EPS)
    a = inv.reshape(-1, 1)
    c = (beta.astype(jnp.float32) - mean * inv).reshape(-1, 1)
    return a, c


def double_conv(x, w1, g1, b1, w2, g2, b2, *, compute_dtype=jnp.bfloat16):
    """x: (N, Cin, L); w1: (Cmid, Cin, 11); w2: (Cout, Cmid, 7). Returns (N, Cout, L) f32."""
    N, Cin, L = x.shape
    Cmid = w1.shape[0]
    Cout = w2.shape[0]

    G = max(P1, P2)                          # per-sample halo (zero gap) width
    Lg = _round_up(L + 2 * G, 128)           # lane-aligned per-sample block width
    TB = _pick_samples_per_tile(N, Lg)       # samples per grid step
    n_tiles = N // TB
    T = TB * Lg                              # lanes per tile (multiple of 128)
    count = N * L                            # BN element count (valid columns only)

    # --- wrapper-side layout plumbing (gapped lane-dense slab) ---------------
    x_t = jnp.transpose(x, (1, 0, 2)).astype(compute_dtype)           # (Cin, N, L)
    x_slab = (jnp.zeros((Cin, N, Lg), compute_dtype)
              .at[:, :, G:G + L].set(x_t).reshape(Cin, N * Lg))
    mask = (jnp.zeros((1, N, Lg), jnp.float32)
            .at[:, :, G:G + L].set(1.0).reshape(1, N * Lg))
    w1_taps = jnp.transpose(w1, (2, 0, 1)).astype(compute_dtype)      # (K1, Cmid, Cin)
    w2_taps = jnp.transpose(w2, (2, 0, 1)).astype(compute_dtype)      # (K2, Cout, Cmid)

    parallel = pltpu.CompilerParams(dimension_semantics=("parallel",))

    # --- pass A: conv1 + BN1 partial stats -----------------------------------
    h_slab, stats1 = pl.pallas_call(
        functools.partial(_conv_stats_kernel, K=K1, P=P1),
        out_shape=(jax.ShapeDtypeStruct((Cmid, N * Lg), compute_dtype),
                   jax.ShapeDtypeStruct((n_tiles, Cmid, 2), jnp.float32)),
        grid_spec=pltpu.PrefetchScalarGridSpec(
            num_scalar_prefetch=0,
            grid=(n_tiles,),
            in_specs=[
                pl.BlockSpec((Cin, T), lambda t: (0, t)),
                pl.BlockSpec((K1, Cmid, Cin), lambda t: (0, 0, 0)),
                pl.BlockSpec((1, T), lambda t: (0, t)),
            ],
            out_specs=[
                pl.BlockSpec((Cmid, T), lambda t: (0, t)),
                pl.BlockSpec((1, Cmid, 2), lambda t: (t, 0, 0)),
            ],
        ),
        compiler_params=parallel,
    )(x_slab, w1_taps, mask)

    a1, c1 = _bn_fold(stats1, g1, b1, count)                 # tiny O(Cmid) combine

    # --- pass B: BN1 + LeakyReLU + conv2 + BN2 partial stats ------------------
    y_slab, stats2 = pl.pallas_call(
        functools.partial(_bn_conv_stats_kernel, K=K2, P=P2, mxu_dtype=compute_dtype),
        out_shape=(jax.ShapeDtypeStruct((Cout, N * Lg), compute_dtype),
                   jax.ShapeDtypeStruct((n_tiles, Cout, 2), jnp.float32)),
        grid_spec=pltpu.PrefetchScalarGridSpec(
            num_scalar_prefetch=0,
            grid=(n_tiles,),
            in_specs=[
                pl.BlockSpec((Cmid, T), lambda t: (0, t)),
                pl.BlockSpec((1, T), lambda t: (0, t)),
                pl.BlockSpec((Cmid, 1), lambda t: (0, 0)),
                pl.BlockSpec((Cmid, 1), lambda t: (0, 0)),
                pl.BlockSpec((K2, Cout, Cmid), lambda t: (0, 0, 0)),
            ],
            out_specs=[
                pl.BlockSpec((Cout, T), lambda t: (0, t)),
                pl.BlockSpec((1, Cout, 2), lambda t: (t, 0, 0)),
            ],
        ),
        compiler_params=parallel,
    )(h_slab, mask, a1, c1, w2_taps)

    a2, c2 = _bn_fold(stats2, g2, b2, count)                 # tiny O(Cout) combine

    # --- pass C: BN2 + LeakyReLU ---------------------------------------------
    out_slab = pl.pallas_call(
        _bn_act_kernel,
        out_shape=jax.ShapeDtypeStruct((Cout, N * Lg), jnp.float32),
        grid_spec=pltpu.PrefetchScalarGridSpec(
            num_scalar_prefetch=0,
            grid=(n_tiles,),
            in_specs=[
                pl.BlockSpec((Cout, T), lambda t: (0, t)),
                pl.BlockSpec((Cout, 1), lambda t: (0, 0)),
                pl.BlockSpec((Cout, 1), lambda t: (0, 0)),
            ],
            out_specs=pl.BlockSpec((Cout, T), lambda t: (0, t)),
        ),
        compiler_params=parallel,
    )(y_slab, a2, c2)

    # (Cout, N*Lg) gapped slab -> (N, Cout, L): drop gap columns, restore layout.
    out = out_slab.reshape(Cout, N, Lg)[:, :, G:G + L]
    return jnp.transpose(out, (1, 0, 2))


def double_conv_ref(x, w1, g1, b1, w2, g2, b2):
    """Pure-JAX reference mirroring the PyTorch module in training mode."""
    def conv(x, w, pad):
        return lax.conv_general_dilated(
            x, w, window_strides=(1,), padding=[(pad, pad)],
            dimension_numbers=('NCH', 'OIH', 'NCH'))

    def bn_lrelu(h, g, b):
        mean = h.mean(axis=(0, 2), keepdims=True)
        var = ((h - mean) ** 2).mean(axis=(0, 2), keepdims=True)
        h = (h - mean) / jnp.sqrt(var + EPS)
        h = h * g.reshape(1, -1, 1) + b.reshape(1, -1, 1)
        return jnp.where(h >= 0, h, NEG_SLOPE * h)

    h = bn_lrelu(conv(x, w1, P1), g1, b1)
    return bn_lrelu(conv(h, w2, P2), g2, b2)


if __name__ == "__main__":
    # Small, deterministic problem: N=2, in_channels=4, mid=out=8, length=16.
    N, Cin, Cmid, Cout, L = 2, 4, 8, 8, 16
    key = jax.random.PRNGKey(0)
    kx, kw1, kw2, kg1, kb1, kg2, kb2 = jax.random.split(key, 7)

    x = jax.random.normal(kx, (N, Cin, L), jnp.float32)
    w1 = jax.random.normal(kw1, (Cmid, Cin, K1), jnp.float32) * (1.0 / (Cin * K1) ** 0.5)
    w2 = jax.random.normal(kw2, (Cout, Cmid, K2), jnp.float32) * (1.0 / (Cmid * K2) ** 0.5)
    g1 = 1.0 + 0.1 * jax.random.normal(kg1, (Cmid,), jnp.float32)
    b1 = 0.1 * jax.random.normal(kb1, (Cmid,), jnp.float32)
    g2 = 1.0 + 0.1 * jax.random.normal(kg2, (Cout,), jnp.float32)
    b2 = 0.1 * jax.random.normal(kb2, (Cout,), jnp.float32)

    ref = double_conv_ref(x, w1, g1, b1, w2, g2, b2)

    # Exact-semantics path: f32 MXU operands and f32 intermediates.
    out_f32 = jax.block_until_ready(
        double_conv(x, w1, g1, b1, w2, g2, b2, compute_dtype=jnp.float32))
    assert out_f32.shape == (N, Cout, L)
    assert jnp.allclose(out_f32, ref, atol=1e-3, rtol=1e-3), (
        f"f32 max abs err {jnp.max(jnp.abs(out_f32 - ref))}")

    # Default fast path: bf16 MXU operands/intermediates, f32 acc + BN math.
    out_bf16 = jax.block_until_ready(double_conv(x, w1, g1, b1, w2, g2, b2))
    assert out_bf16.shape == (N, Cout, L)
    assert jnp.allclose(out_bf16, ref, atol=1e-1, rtol=1e-1), (
        f"bf16 max abs err {jnp.max(jnp.abs(out_bf16 - ref))}")

    print("KERNEL_OK")
</pallas_src>

<mosaic_0001>
module attributes {stable_mosaic.version = 11 : i64} {
  func.func @_conv_stats_kernel(%arg0: i32, %arg1: memref<4x256xf32, #tpu.memory_space<vmem>>, %arg2: memref<11x8x4xf32, #tpu.memory_space<vmem>>, %arg3: memref<1x256xf32, #tpu.memory_space<vmem>>, %arg4: memref<8x256xf32, #tpu.memory_space<vmem>>, %arg5: memref<1x8x2xf32, #tpu.memory_space<vmem>>) attributes {dimension_semantics = [#tpu.dimension_semantics<parallel>], iteration_bounds = array<i64: 1>, scalar_prefetch = 0 : i64, scratch_operands = 0 : i64, tpu.core_type = #tpu.core_type<tc>, window_params = [{transform_indices = @transform_0, window_bounds = array<i64: 4, 256>}, {pipeline_mode = #tpu.pipeline_mode<synchronous>, transform_indices = @transform_1, window_bounds = array<i64: 11, 8, 4>}, {transform_indices = @transform_2, window_bounds = array<i64: 1, 256>}, {transform_indices = @transform_3, window_bounds = array<i64: 8, 256>}, {transform_indices = @transform_4, window_bounds = array<i64: 1, 8, 2>}]} {
    %c0 = arith.constant 0 : index
    %c0_0 = arith.constant 0 : index
    %0 = vector.load %arg1[%c0, %c0_0] : memref<4x256xf32, #tpu.memory_space<vmem>>, vector<4x256xf32>
    %cst = arith.constant 0.000000e+00 : f32
    %1 = vector.broadcast %cst : f32 to vector<8x256xf32>
    %c5_i32 = arith.constant 5 : i32
    %2 = tpu.dynamic_rotate %0 by %c5_i32 dim 1 : vector<4x256xf32>, i32 -> vector<4x256xf32>
    %c0_1 = arith.constant 0 : index
    %c0_2 = arith.constant 0 : index
    %c0_3 = arith.constant 0 : index
    %3 = vector.load %arg2[%c0_1, %c0_2, %c0_3] : memref<11x8x4xf32, #tpu.memory_space<vmem>>, vector<1x8x4xf32>
    %4 = vector.shape_cast %3 : vector<1x8x4xf32> to vector<8x4xf32>
    %cst_4 = arith.constant dense<0.000000e+00> : vector<8x256xf32>
    %5 = tpu.matmul %4, %2, %cst_4 {dimension_numbers = #tpu.dot_dimension_numbers<[1], [0], [0], [1], [0, 0, 1, 1], [], []>} : vector<8x4xf32>, vector<4x256xf32>, vector<8x256xf32> -> vector<8x256xf32>
    %6 = arith.addf %1, %5 : vector<8x256xf32>
    %c4_i32 = arith.constant 4 : i32
    %7 = tpu.dynamic_rotate %0 by %c4_i32 dim 1 : vector<4x256xf32>, i32 -> vector<4x256xf32>
    %c1 = arith.constant 1 : index
    %c0_5 = arith.constant 0 : index
    %c0_6 = arith.constant 0 : index
    %8 = vector.load %arg2[%c1, %c0_5, %c0_6] : memref<11x8x4xf32, #tpu.memory_space<vmem>>, vector<1x8x4xf32>
    %9 = vector.shape_cast %8 : vector<1x8x4xf32> to vector<8x4xf32>
    %cst_7 = arith.constant dense<0.000000e+00> : vector<8x256xf32>
    %10 = tpu.matmul %9, %7, %cst_7 {dimension_numbers = #tpu.dot_dimension_numbers<[1], [0], [0], [1], [0, 0, 1, 1], [], []>} : vector<8x4xf32>, vector<4x256xf32>, vector<8x256xf32> -> vector<8x256xf32>
    %11 = arith.addf %6, %10 : vector<8x256xf32>
    %c3_i32 = arith.constant 3 : i32
    %12 = tpu.dynamic_rotate %0 by %c3_i32 dim 1 : vector<4x256xf32>, i32 -> vector<4x256xf32>
    %c2 = arith.constant 2 : index
    %c0_8 = arith.constant 0 : index
    %c0_9 = arith.constant 0 : index
    %13 = vector.load %arg2[%c2, %c0_8, %c0_9] : memref<11x8x4xf32, #tpu.memory_space<vmem>>, vector<1x8x4xf32>
    %14 = vector.shape_cast %13 : vector<1x8x4xf32> to vector<8x4xf32>
    %cst_10 = arith.constant dense<0.000000e+00> : vector<8x256xf32>
    %15 = tpu.matmul %14, %12, %cst_10 {dimension_numbers = #tpu.dot_dimension_numbers<[1], [0], [0], [1], [0, 0, 1, 1], [], []>} : vector<8x4xf32>, vector<4x256xf32>, vector<8x256xf32> -> vector<8x256xf32>
    %16 = arith.addf %11, %15 : vector<8x256xf32>
    %c2_i32 = arith.constant 2 : i32
    %17 = tpu.dynamic_rotate %0 by %c2_i32 dim 1 : vector<4x256xf32>, i32 -> vector<4x256xf32>
    %c3 = arith.constant 3 : index
    %c0_11 = arith.constant 0 : index
    %c0_12 = arith.constant 0 : index
    %18 = vector.load %arg2[%c3, %c0_11, %c0_12] : memref<11x8x4xf32, #tpu.memory_space<vmem>>, vector<1x8x4xf32>
    %19 = vector.shape_cast %18 : vector<1x8x4xf32> to vector<8x4xf32>
    %cst_13 = arith.constant dense<0.000000e+00> : vector<8x256xf32>
    %20 = tpu.matmul %19, %17, %cst_13 {dimension_numbers = #tpu.dot_dimension_numbers<[1], [0], [0], [1], [0, 0, 1, 1], [], []>} : vector<8x4xf32>, vector<4x256xf32>, vector<8x256xf32> -> vector<8x256xf32>
    %21 = arith.addf %16, %20 : vector<8x256xf32>
    %c1_i32 = arith.constant 1 : i32
    %22 = tpu.dynamic_rotate %0 by %c1_i32 dim 1 : vector<4x256xf32>, i32 -> vector<4x256xf32>
    %c4 = arith.constant 4 : index
    %c0_14 = arith.constant 0 : index
    %c0_15 = arith.constant 0 : index
    %23 = vector.load %arg2[%c4, %c0_14, %c0_15] : memref<11x8x4xf32, #tpu.memory_space<vmem>>, vector<1x8x4xf32>
    %24 = vector.shape_cast %23 : vector<1x8x4xf32> to vector<8x4xf32>
    %cst_16 = arith.constant dense<0.000000e+00> : vector<8x256xf32>
    %25 = tpu.matmul %24, %22, %cst_16 {dimension_numbers = #tpu.dot_dimension_numbers<[1], [0], [0], [1], [0, 0, 1, 1], [], []>} : vector<8x4xf32>, vector<4x256xf32>, vector<8x256xf32> -> vector<8x256xf32>
    %26 = arith.addf %21, %25 : vector<8x256xf32>
    %c0_i32 = arith.constant 0 : i32
    %27 = tpu.dynamic_rotate %0 by %c0_i32 dim 1 : vector<4x256xf32>, i32 -> vector<4x256xf32>
    %c5 = arith.constant 5 : index
    %c0_17 = arith.constant 0 : index
    %c0_18 = arith.constant 0 : index
    %28 = vector.load %arg2[%c5, %c0_17, %c0_18] : memref<11x8x4xf32, #tpu.memory_space<vmem>>, vector<1x8x4xf32>
    %29 = vector.shape_cast %28 : vector<1x8x4xf32> to vector<8x4xf32>
    %cst_19 = arith.constant dense<0.000000e+00> : vector<8x256xf32>
    %30 = tpu.matmul %29, %27, %cst_19 {dimension_numbers = #tpu.dot_dimension_numbers<[1], [0], [0], [1], [0, 0, 1, 1], [], []>} : vector<8x4xf32>, vector<4x256xf32>, vector<8x256xf32> -> vector<8x256xf32>
    %31 = arith.addf %26, %30 : vector<8x256xf32>
    %c255_i32 = arith.constant 255 : i32
    %32 = tpu.dynamic_rotate %0 by %c255_i32 dim 1 : vector<4x256xf32>, i32 -> vector<4x256xf32>
    %c6 = arith.constant 6 : index
    %c0_20 = arith.constant 0 : index
    %c0_21 = arith.constant 0 : index
    %33 = vector.load %arg2[%c6, %c0_20, %c0_21] : memref<11x8x4xf32, #tpu.memory_space<vmem>>, vector<1x8x4xf32>
    %34 = vector.shape_cast %33 : vector<1x8x4xf32> to vector<8x4xf32>
    %cst_22 = arith.constant dense<0.000000e+00> : vector<8x256xf32>
    %35 = tpu.matmul %34, %32, %cst_22 {dimension_numbers = #tpu.dot_dimension_numbers<[1], [0], [0], [1], [0, 0, 1, 1], [], []>} : vector<8x4xf32>, vector<4x256xf32>, vector<8x256xf32> -> vector<8x256xf32>
    %36 = arith.addf %31, %35 : vector<8x256xf32>
    %c254_i32 = arith.constant 254 : i32
    %37 = tpu.dynamic_rotate %0 by %c254_i32 dim 1 : vector<4x256xf32>, i32 -> vector<4x256xf32>
    %c7 = arith.constant 7 : index
    %c0_23 = arith.constant 0 : index
    %c0_24 = arith.constant 0 : index
    %38 = vector.load %arg2[%c7, %c0_23, %c0_24] : memref<11x8x4xf32, #tpu.memory_space<vmem>>, vector<1x8x4xf32>
    %39 = vector.shape_cast %38 : vector<1x8x4xf32> to vector<8x4xf32>
    %cst_25 = arith.constant dense<0.000000e+00> : vector<8x256xf32>
    %40 = tpu.matmul %39, %37, %cst_25 {dimension_numbers = #tpu.dot_dimension_numbers<[1], [0], [0], [1], [0, 0, 1, 1], [], []>} : vector<8x4xf32>, vector<4x256xf32>, vector<8x256xf32> -> vector<8x256xf32>
    %41 = arith.addf %36, %40 : vector<8x256xf32>
    %c253_i32 = arith.constant 253 : i32
    %42 = tpu.dynamic_rotate %0 by %c253_i32 dim 1 : vector<4x256xf32>, i32 -> vector<4x256xf32>
    %c8 = arith.constant 8 : index
    %c0_26 = arith.constant 0 : index
    %c0_27 = arith.constant 0 : index
    %43 = vector.load %arg2[%c8, %c0_26, %c0_27] : memref<11x8x4xf32, #tpu.memory_space<vmem>>, vector<1x8x4xf32>
    %44 = vector.shape_cast %43 : vector<1x8x4xf32> to vector<8x4xf32>
    %cst_28 = arith.constant dense<0.000000e+00> : vector<8x256xf32>
    %45 = tpu.matmul %44, %42, %cst_28 {dimension_numbers = #tpu.dot_dimension_numbers<[1], [0], [0], [1], [0, 0, 1, 1], [], []>} : vector<8x4xf32>, vector<4x256xf32>, vector<8x256xf32> -> vector<8x256xf32>
    %46 = arith.addf %41, %45 : vector<8x256xf32>
    %c252_i32 = arith.constant 252 : i32
    %47 = tpu.dynamic_rotate %0 by %c252_i32 dim 1 : vector<4x256xf32>, i32 -> vector<4x256xf32>
    %c9 = arith.constant 9 : index
    %c0_29 = arith.constant 0 : index
    %c0_30 = arith.constant 0 : index
    %48 = vector.load %arg2[%c9, %c0_29, %c0_30] : memref<11x8x4xf32, #tpu.memory_space<vmem>>, vector<1x8x4xf32>
    %49 = vector.shape_cast %48 : vector<1x8x4xf32> to vector<8x4xf32>
    %cst_31 = arith.constant dense<0.000000e+00> : vector<8x256xf32>
    %50 = tpu.matmul %49, %47, %cst_31 {dimension_numbers = #tpu.dot_dimension_numbers<[1], [0], [0], [1], [0, 0, 1, 1], [], []>} : vector<8x4xf32>, vector<4x256xf32>, vector<8x256xf32> -> vector<8x256xf32>
    %51 = arith.addf %46, %50 : vector<8x256xf32>
    %c251_i32 = arith.constant 251 : i32
    %52 = tpu.dynamic_rotate %0 by %c251_i32 dim 1 : vector<4x256xf32>, i32 -> vector<4x256xf32>
    %c10 = arith.constant 10 : index
    %c0_32 = arith.constant 0 : index
    %c0_33 = arith.constant 0 : index
    %53 = vector.load %arg2[%c10, %c0_32, %c0_33] : memref<11x8x4xf32, #tpu.memory_space<vmem>>, vector<1x8x4xf32>
    %54 = vector.shape_cast %53 : vector<1x8x4xf32> to vector<8x4xf32>
    %cst_34 = arith.constant dense<0.000000e+00> : vector<8x256xf32>
    %55 = tpu.matmul %54, %52, %cst_34 {dimension_numbers = #tpu.dot_dimension_numbers<[1], [0], [0], [1], [0, 0, 1, 1], [], []>} : vector<8x4xf32>, vector<4x256xf32>, vector<8x256xf32> -> vector<8x256xf32>
    %56 = arith.addf %51, %55 : vector<8x256xf32>
    %c0_35 = arith.constant 0 : index
    %c0_36 = arith.constant 0 : index
    %57 = vector.load %arg3[%c0_35, %c0_36] : memref<1x256xf32, #tpu.memory_space<vmem>>, vector<1x256xf32>
    %58 = vector.broadcast %57 : vector<1x256xf32> to vector<8x256xf32>
    %59 = arith.mulf %56, %58 : vector<8x256xf32>
    %c0_37 = arith.constant 0 : index
    %c0_38 = arith.constant 0 : index
    %60 = vector.load %arg4[%c0_37, %c0_38] : memref<8x256xf32, #tpu.memory_space<vmem>>, vector<8x256xf32>
    tpu.vector_store %arg4[%c0_37, %c0_38], %59 {strides = array<i32>} : memref<8x256xf32, #tpu.memory_space<vmem>>, vector<8x256xf32>,
    %cst_39 = arith.constant dense<0.000000e+00> : vector<8xf32>
    %61 = vector.multi_reduction <add>, %59, %cst_39 [1] : vector<8x256xf32> to vector<8xf32>
    %62 = vector.shape_cast %61 : vector<8xf32> to vector<8x1xf32>
    %63 = arith.mulf %59, %59 : vector<8x256xf32>
    %cst_40 = arith.constant dense<0.000000e+00> : vector<8xf32>
    %64 = vector.multi_reduction <add>, %63, %cst_40 [1] : vector<8x256xf32> to vector<8xf32>
    %65 = vector.shape_cast %64 : vector<8xf32> to vector<8x1xf32>
    %66 = tpu.concatenate %62, %65 in 1 : vector<8x1xf32>, vector<8x1xf32> -> vector<8x2xf32>
    %c0_41 = arith.constant 0 : index
    %c0_42 = arith.constant 0 : index
    %c0_43 = arith.constant 0 : index
    %67 = vector.load %arg5[%c0_41, %c0_42, %c0_43] : memref<1x8x2xf32, #tpu.memory_space<vmem>>, vector<1x8x2xf32>
    %68 = vector.shape_cast %67 : vector<1x8x2xf32> to vector<8x2xf32>
    %69 = vector.shape_cast %66 : vector<8x2xf32> to vector<1x8x2xf32>
    tpu.vector_store %arg5[%c0_41, %c0_42, %c0_43], %69 {strides = array<i32>} : memref<1x8x2xf32, #tpu.memory_space<vmem>>, vector<1x8x2xf32>,
    return
  }
  func.func @transform_0(%arg0: i32) -> (i32, i32) {
    %c0_i32 = arith.constant 0 : i32
    %c0_i32_0 = arith.constant 0 : i32
    return %c0_i32, %arg0 : i32, i32
  }
  func.func @transform_1(%arg0: i32) -> (i32, i32, i32) {
    %c0_i32 = arith.constant 0 : i32
    %c0_i32_0 = arith.constant 0 : i32
    %c0_i32_1 = arith.constant 0 : i32
    %c0_i32_2 = arith.constant 0 : i32
    return %c0_i32, %c0_i32_0, %c0_i32_1 : i32, i32, i32
  }
  func.func @transform_2(%arg0: i32) -> (i32, i32) {
    %c0_i32 = arith.constant 0 : i32
    %c0_i32_0 = arith.constant 0 : i32
    return %c0_i32, %arg0 : i32, i32
  }
  func.func @transform_3(%arg0: i32) -> (i32, i32) {
    %c0_i32 = arith.constant 0 : i32
    %c0_i32_0 = arith.constant 0 : i32
    return %c0_i32, %arg0 : i32, i32
  }
  func.func @transform_4(%arg0: i32) -> (i32, i32, i32) {
    %c0_i32 = arith.constant 0 : i32
    %c0_i32_0 = arith.constant 0 : i32
    %c0_i32_1 = arith.constant 0 : i32
    return %arg0, %c0_i32, %c0_i32_0 : i32, i32, i32
  }
}

</mosaic_0001>

<llo_original>
// kernel: tpu_custom_call.1
$region0: #{tpu_custom_call.1}
  #allocation0 [shape = 'u32[]', space=smem, size = 0x4, offset = 0x4, fixed_abs, tag = 'smem constant byte address 0x4 - core index']
  #allocation1 [shape = 'u32[144,128]{1,0:T(1,128)}', space=vmem, size = 0x12000, scoped, tag = 'internal scratch']
  %s0 = inlined_call_operand.vmem [shape: f32[4,256], index: 0, kind: input, shape index: {}]
  %s1 = inlined_call_operand.vmem [shape: f32[11,8,4], index: 1, kind: input, shape index: {}]
  %s2 = inlined_call_operand.vmem [shape: f32[1,256], index: 2, kind: input, shape index: {}]
  %s3 = inlined_call_operand.hbm [shape: f32[8,256], index: 3, kind: output, shape index: {0}]
  %s4 = inlined_call_operand.vmem [shape: f32[1,8,2], index: 4, kind: output, shape index: {1}]
  %5 = xla_tuple %s3, %s4
  %s6 = sld [smem:[#allocation0]]
  $region30: #{tpu_custom_call.1} parent=0
    _
  %s8 = ssub.s32 1, %s6
  %s9 = scalar_select 0, %s8, %s6
  $region1: #{tpu_custom_call.1} parent=0
    #allocation2 [shape = 'u8[8192]{0}', space=vmem, size = 0x2000, scoped, tag = 'output window, operand 0, single buffered']
    #allocation3 [shape = 's32[1]{0}', space=sflag, size = 0x4, scoped, tag = 'scoped memory for tpu_custom_call.1']
    %10 = vsyncpa [#allocation3], 0
    // Predicated region
    $region2: #{tpu_custom_call.1} parent=1 // pred_check
      _
    $region3: #{tpu_custom_call.1} parent=1 // pred_check_branch
      %12 = sbr.rel (0) target = $region5
    $region4: #{tpu_custom_call.1} parent=1 // pred_region
      _
    $region5: #{tpu_custom_call.1} parent=1 // pred_fallthru
      _
    // Predicated region
    $region6: #{tpu_custom_call.1} parent=1 // pred_check
      _
    $region7: #{tpu_custom_call.1} parent=1 // pred_check_branch
      %14 = sbr.rel (0) target = $region9
    $region8: #{tpu_custom_call.1} parent=1 // pred_region
      _
    $region9: #{tpu_custom_call.1} parent=1 // pred_fallthru
      _
    // Predicated region
    $region10: #{tpu_custom_call.1} parent=1 // pred_check
      _
    $region11: #{tpu_custom_call.1} parent=1 // pred_check_branch
      %16 = sbr.rel (0) target = $region13
    $region12: #{tpu_custom_call.1} parent=1 // pred_region
      _
    $region13: #{tpu_custom_call.1} parent=1 // pred_fallthru
      _
    %v17 = vld [vmem:[%s0] sm:$0xff]
    %v19 = vcombine.high %v17, %v17
    %21 = vrot.lane.b32.xlu0 %v17, 5
    %v22 = vpop.permute.xlu0 %21
    %23 = vrot.lane.b32.xlu0 %v19, 5
    %v24 = vpop.permute.xlu0 %23
    %v25 = vlaneseq
    %v26 = vand.u32 %v25, 127
    %vm27 = vcmp.lt.s32.totalorder %v26, 5
    %v28 = vsel %vm27, %v22, %v24
    %v29 = vsel %vm27, %v24, %v22
    %v30 = vld [vmem:[%s1] sm:$0xff]
    %31 = vrot.lane.b32.xlu0 %v17, 4
    %v32 = vpop.permute.xlu0 %31
    %33 = vrot.lane.b32.xlu0 %v19, 4
    %v34 = vpop.permute.xlu0 %33
    %vm35 = vcmp.lt.s32.totalorder %v26, 4
    %v36 = vsel %vm35, %v32, %v34
    %v37 = vsel %vm35, %v34, %v32
    %s38 = scalar_lea.vmem %s1, 8
    %v39 = vld [vmem:[%s38] sm:$0xff]
    %vm40 = vcmask 31744
    %v42 = vsel %vm40, %v39, 0
    %vm44 = vcmask 1043456
    %v46 = vsel %vm44, %v37, 0
    %v49 = vsel %vm44, %v36, 0
    %51 = vmatprep.subr.mxu0 %v49
    %52 = vmatpush1.msra.mxu0 %v46
    %53 = vmatprep.subr.mxu0 0.0
    %54 = vmatpush1.msra.mxu0 0.0
    %55 = vmatprep.subr.mxu0 0.0
    %56 = vmatpush1.msra.mxu0 0.0
    %57 = vmatprep.subr.mxu0 0.0
    %58 = vmatpush1.msra.mxu0 0.0
    %59 = vmatprep.subr.mxu0 0.0
    %60 = vmatpush1.msra.mxu0 0.0
    %61 = vmatprep.subr.mxu0 0.0
    %62 = vmatpush1.msra.mxu0 0.0
    %63 = vmatprep.subr.mxu0 0.0
    %64 = vmatpush1.msra.mxu0 0.0
    %65 = vmatprep.subr.mxu0 0.0
    %66 = vmatpush1.msra.mxu0 0.0
    %67 = vmatprep.subr.mxu0 0.0
    %68 = vmatpush1.msra.mxu0 0.0
    %69 = vmatprep.subr.mxu0 0.0
    %70 = vmatpush1.msra.mxu0 0.0
    %71 = vmatprep.subr.mxu0 0.0
    %72 = vmatpush1.msra.mxu0 0.0
    %73 = vmatprep.subr.mxu0 0.0
    %74 = vmatpush1.msra.mxu0 0.0
    %75 = vmatprep.subr.mxu0 0.0
    %76 = vmatpush1.msra.mxu0 0.0
    %77 = vmatprep.subr.mxu0 0.0
    %78 = vmatpush1.msra.mxu0 0.0
    %79 = vmatprep.subr.mxu0 0.0
    %80 = vmatpush1.msra.mxu0 0.0
    %81 = vmatprep.subr.mxu0 0.0
    %82 = vmatpush1.msra.mxu0 0.0
    %83 = vmatprep.subr.mxu0 0.0
    %84 = vmatpush1.msra.mxu0 0.0
    %85 = vmatprep.subr.mxu0 0.0
    %86 = vmatpush1.msra.mxu0 0.0
    %87 = vmatprep.subr.mxu0 0.0
    %88 = vmatpush1.msra.mxu0 0.0
    %89 = vmatprep.subr.mxu0 0.0
    %90 = vmatpush1.msra.mxu0 0.0
    %91 = vmatprep.subr.mxu0 0.0
    %92 = vmatpush1.msra.mxu0 0.0
    %93 = vmatprep.subr.mxu0 0.0
    %94 = vmatpush1.msra.mxu0 0.0
    %95 = vmatprep.subr.mxu0 0.0
    %96 = vmatpush1.msra.mxu0 0.0
    %97 = vmatprep.subr.mxu0 0.0
    %98 = vmatpush1.msra.mxu0 0.0
    %99 = vmatprep.subr.mxu0 0.0
    %100 = vmatpush1.msra.mxu0 0.0
    %101 = vmatprep.subr.mxu0 0.0
    %102 = vmatpush1.msra.mxu0 0.0
    %103 = vmatprep.subr.mxu0 0.0
    %104 = vmatpush1.msra.mxu0 0.0
    %105 = vmatprep.subr.mxu0 0.0
    %106 = vmatpush1.msra.mxu0 0.0
    %107 = vmatprep.subr.mxu0 0.0
    %108 = vmatpush1.msra.mxu0 0.0
    %109 = vmatprep.subr.mxu0 0.0
    %110 = vmatpush1.msra.mxu0 0.0
    %111 = vmatprep.subr.mxu0 0.0
    %112 = vmatpush1.msra.mxu0 0.0
    %113 = vmatprep.subr.mxu0 0.0
    %114 = vmatpush1.msra.mxu0 0.0
    %115 = vmatprep.mubr.f32.mxu0 0.0
    %116 = vmatmul.mubr.f32.gmra.mrb[0].mxu0 %v42
    %v117 = vpop.f32.mrb[0].mxu0
    %v118 = vadd.f32 0.0, %v117
    %v119 = vpop.f32.mrb[0].mxu0
    %v120 = vadd.f32 0.0, %v119
    %121 = vdwg.mxu0
    %v123 = vsel %vm40, %v30, 0
    %v126 = vsel %vm44, %v29, 0
    %v129 = vsel %vm44, %v28, 0
    %131 = vmatprep.subr.mxu0 %v129
    %132 = vmatpush1.msra.mxu0 %v126
    %133 = vmatprep.subr.mxu0 0.0
    %134 = vmatpush1.msra.mxu0 0.0
    %135 = vmatprep.subr.mxu0 0.0
    %136 = vmatpush1.msra.mxu0 0.0
    %137 = vmatprep.subr.mxu0 0.0
    %138 = vmatpush1.msra.mxu0 0.0
    %139 = vmatprep.subr.mxu0 0.0
    %140 = vmatpush1.msra.mxu0 0.0
    %141 = vmatprep.subr.mxu0 0.0
    %142 = vmatpush1.msra.mxu0 0.0
    %143 = vmatprep.subr.mxu0 0.0
    %144 = vmatpush1.msra.mxu0 0.0
    %145 = vmatprep.subr.mxu0 0.0
    %146 = vmatpush1.msra.mxu0 0.0
    %147 = vmatprep.subr.mxu0 0.0
    %148 = vmatpush1.msra.mxu0 0.0
    %149 = vmatprep.subr.mxu0 0.0
    %150 = vmatpush1.msra.mxu0 0.0
    %151 = vmatprep.subr.mxu0 0.0
    %152 = vmatpush1.msra.mxu0 0.0
    %153 = vmatprep.subr.mxu0 0.0
    %154 = vmatpush1.msra.mxu0 0.0
    %155 = vmatprep.subr.mxu0 0.0
    %156 = vmatpush1.msra.mxu0 0.0
    %157 = vmatprep.subr.mxu0 0.0
    %158 = vmatpush1.msra.mxu0 0.0
    %159 = vmatprep.subr.mxu0 0.0
    %160 = vmatpush1.msra.mxu0 0.0
    %161 = vmatprep.subr.mxu0 0.0
    %162 = vmatpush1.msra.mxu0 0.0
    %163 = vmatprep.subr.mxu0 0.0
    %164 = vmatpush1.msra.mxu0 0.0
    %165 = vmatprep.subr.mxu0 0.0
    %166 = vmatpush1.msra.mxu0 0.0
    %167 = vmatprep.subr.mxu0 0.0
    %168 = vmatpush1.msra.mxu0 0.0
    %169 = vmatprep.subr.mxu0 0.0
    %170 = vmatpush1.msra.mxu0 0.0
    %171 = vmatprep.subr.mxu0 0.0
    %172 = vmatpush1.msra.mxu0 0.0
    %173 = vmatprep.subr.mxu0 0.0
    %174 = vmatpush1.msra.mxu0 0.0
    %175 = vmatprep.subr.mxu0 0.0
    %176 = vmatpush1.msra.mxu0 0.0
    %177 = vmatprep.subr.mxu0 0.0
    %178 = vmatpush1.msra.mxu0 0.0
    %179 = vmatprep.subr.mxu0 0.0
    %180 = vmatpush1.msra.mxu0 0.0
    %181 = vmatprep.subr.mxu0 0.0
    %182 = vmatpush1.msra.mxu0 0.0
    %183 = vmatprep.subr.mxu0 0.0
    %184 = vmatpush1.msra.mxu0 0.0
    %185 = vmatprep.subr.mxu0 0.0
    %186 = vmatpush1.msra.mxu0 0.0
    %187 = vmatprep.subr.mxu0 0.0
    %188 = vmatpush1.msra.mxu0 0.0
    %189 = vmatprep.subr.mxu0 0.0
    %190 = vmatpush1.msra.mxu0 0.0
    %191 = vmatprep.subr.mxu0 0.0
    %192 = vmatpush1.msra.mxu0 0.0
    %193 = vmatprep.subr.mxu0 0.0
    %194 = vmatpush1.msra.mxu0 0.0
    %195 = vmatprep.mubr.f32.mxu0 0.0
    %196 = vmatmul.mubr.f32.gmra.mrb[0].mxu0 %v123
    %v197 = vpop.f32.mrb[0].mxu0
    %v198 = vadd.f32 %v118, %v197
    %v199 = vpop.f32.mrb[0].mxu0
    %v200 = vadd.f32 %v120, %v199
    %201 = vdwg.mxu0
    %202 = vrot.lane.b32.xlu0 %v17, 3
    %v203 = vpop.permute.xlu0 %202
    %204 = vrot.lane.b32.xlu0 %v19, 3
    %v205 = vpop.permute.xlu0 %204
    %vm206 = vcmp.lt.s32.totalorder %v26, 3
    %v207 = vsel %vm206, %v203, %v205
    %v208 = vsel %vm206, %v205, %v203
    %s209 = scalar_lea.vmem %s1, 16
    %v210 = vld [vmem:[%s209] sm:$0xff]
    %v212 = vsel %vm40, %v210, 0
    %v215 = vsel %vm44, %v208, 0
    %v218 = vsel %vm44, %v207, 0
    %220 = vmatprep.subr.mxu0 %v218
    %221 = vmatpush1.msra.mxu0 %v215
    %222 = vmatprep.subr.mxu0 0.0
    %223 = vmatpush1.msra.mxu0 0.0
    %224 = vmatprep.subr.mxu0 0.0
    %225 = vmatpush1.msra.mxu0 0.0
    %226 = vmatprep.subr.mxu0 0.0
    %227 = vmatpush1.msra.mxu0 0.0
    %228 = vmatprep.subr.mxu0 0.0
    %229 = vmatpush1.msra.mxu0 0.0
    %230 = vmatprep.subr.mxu0 0.0
    %231 = vmatpush1.msra.mxu0 0.0
    %232 = vmatprep.subr.mxu0 0.0
    %233 = vmatpush1.msra.mxu0 0.0
    %234 = vmatprep.subr.mxu0 0.0
    %235 = vmatpush1.msra.mxu0 0.0
    %236 = vmatprep.subr.mxu0 0.0
    %237 = vmatpush1.msra.mxu0 0.0
    %238 = vmatprep.subr.mxu0 0.0
    %239 = vmatpush1.msra.mxu0 0.0
    %240 = vmatprep.subr.mxu0 0.0
    %241 = vmatpush1.msra.mxu0 0.0
    %242 = vmatprep.subr.mxu0 0.0
    %243 = vmatpush1.msra.mxu0 0.0
    %244 = vmatprep.subr.mxu0 0.0
    %245 = vmatpush1.msra.mxu0 0.0
    %246 = vmatprep.subr.mxu0 0.0
    %247 = vmatpush1.msra.mxu0 0.0
    %248 = vmatprep.subr.mxu0 0.0
    %249 = vmatpush1.msra.mxu0 0.0
    %250 = vmatprep.subr.mxu0 0.0
    %251 = vmatpush1.msra.mxu0 0.0
    %252 = vmatprep.subr.mxu0 0.0
    %253 = vmatpush1.msra.mxu0 0.0
    %254 = vmatprep.subr.mxu0 0.0
    %255 = vmatpush1.msra.mxu0 0.0
    %256 = vmatprep.subr.mxu0 0.0
    %257 = vmatpush1.msra.mxu0 0.0
    %258 = vmatprep.subr.mxu0 0.0
    %259 = vmatpush1.msra.mxu0 0.0
    %260 = vmatprep.subr.mxu0 0.0
    %261 = vmatpush1.msra.mxu0 0.0
    %262 = vmatprep.subr.mxu0 0.0
    %263 = vmatpush1.msra.mxu0 0.0
    %264 = vmatprep.subr.mxu0 0.0
    %265 = vmatpush1.msra.mxu0 0.0
    %266 = vmatprep.subr.mxu0 0.0
    %267 = vmatpush1.msra.mxu0 0.0
    %268 = vmatprep.subr.mxu0 0.0
    %269 = vmatpush1.msra.mxu0 0.0
    %270 = vmatprep.subr.mxu0 0.0
    %271 = vmatpush1.msra.mxu0 0.0
    %272 = vmatprep.subr.mxu0 0.0
    %273 = vmatpush1.msra.mxu0 0.0
    %274 = vmatprep.subr.mxu0 0.0
    %275 = vmatpush1.msra.mxu0 0.0
    %276 = vmatprep.subr.mxu0 0.0
    %277 = vmatpush1.msra.mxu0 0.0
    %278 = vmatprep.subr.mxu0 0.0
    %279 = vmatpush1.msra.mxu0 0.0
    %280 = vmatprep.subr.mxu0 0.0
    %281 = vmatpush1.msra.mxu0 0.0
    %282 = vmatprep.subr.mxu0 0.0
    %283 = vmatpush1.msra.mxu0 0.0
    %284 = vmatprep.mubr.f32.mxu0 0.0
    %285 = vmatmul.mubr.f32.gmra.mrb[0].mxu0 %v212
    %v286 = vpop.f32.mrb[0].mxu0
    %v287 = vadd.f32 0.0, %v286
    %v288 = vpop.f32.mrb[0].mxu0
    %v289 = vadd.f32 0.0, %v288
    %290 = vdwg.mxu0
    %v291 = vadd.f32 %v198, %v287
    %v292 = vadd.f32 %v200, %v289
    %293 = vrot.lane.b32.xlu0 %v17, 2
    %v294 = vpop.permute.xlu0 %293
    %295 = vrot.lane.b32.xlu0 %v19, 2
    %v296 = vpop.permute.xlu0 %295
    %vm297 = vcmp.lt.s32.totalorder %v26, 2
    %v298 = vsel %vm297, %v294, %v296
    %v299 = vsel %vm297, %v296, %v294
    %s300 = scalar_lea.vmem %s1, 24
    %v301 = vld [vmem:[%s300] sm:$0xff]
    %v303 = vsel %vm40, %v301, 0
    %v306 = vsel %vm44, %v299, 0
    %v309 = vsel %vm44, %v298, 0
    %311 = vmatprep.subr.mxu0 %v309
    %312 = vmatpush1.msra.mxu0 %v306
    %313 = vmatprep.subr.mxu0 0.0
    %314 = vmatpush1.msra.mxu0 0.0
    %315 = vmatprep.subr.mxu0 0.0
    %316 = vmatpush1.msra.mxu0 0.0
    %317 = vmatprep.subr.mxu0 0.0
    %318 = vmatpush1.msra.mxu0 0.0
    %319 = vmatprep.subr.mxu0 0.0
    %320 = vmatpush1.msra.mxu0 0.0
    %321 = vmatprep.subr.mxu0 0.0
    %322 = vmatpush1.msra.mxu0 0.0
    %323 = vmatprep.subr.mxu0 0.0
    %324 = vmatpush1.msra.mxu0 0.0
    %325 = vmatprep.subr.mxu0 0.0
    %326 = vmatpush1.msra.mxu0 0.0
    %327 = vmatprep.subr.mxu0 0.0
    %328 = vmatpush1.msra.mxu0 0.0
    %329 = vmatprep.subr.mxu0 0.0
    %330 = vmatpush1.msra.mxu0 0.0
    %331 = vmatprep.subr.mxu0 0.0
    %332 = vmatpush1.msra.mxu0 0.0
    %333 = vmatprep.subr.mxu0 0.0
    %334 = vmatpush1.msra.mxu0 0.0
    %335 = vmatprep.subr.mxu0 0.0
    %336 = vmatpush1.msra.mxu0 0.0
    %337 = vmatprep.subr.mxu0 0.0
    %338 = vmatpush1.msra.mxu0 0.0
    %339 = vmatprep.subr.mxu0 0.0
    %340 = vmatpush1.msra.mxu0 0.0
    %341 = vmatprep.subr.mxu0 0.0
    %342 = vmatpush1.msra.mxu0 0.0
    %343 = vmatprep.subr.mxu0 0.0
    %344 = vmatpush1.msra.mxu0 0.0
    %345 = vmatprep.subr.mxu0 0.0
    %346 = vmatpush1.msra.mxu0 0.0
    %347 = vmatprep.subr.mxu0 0.0
    %348 = vmatpush1.msra.mxu0 0.0
    %349 = vmatprep.subr.mxu0 0.0
    %350 = vmatpush1.msra.mxu0 0.0
    %351 = vmatprep.subr.mxu0 0.0
    %352 = vmatpush1.msra.mxu0 0.0
    %353 = vmatprep.subr.mxu0 0.0
    %354 = vmatpush1.msra.mxu0 0.0
    %355 = vmatprep.subr.mxu0 0.0
    %356 = vmatpush1.msra.mxu0 0.0
    %357 = vmatprep.subr.mxu0 0.0
    %358 = vmatpush1.msra.mxu0 0.0
    %359 = vmatprep.subr.mxu0 0.0
    %360 = vmatpush1.msra.mxu0 0.0
    %361 = vmatprep.subr.mxu0 0.0
    %362 = vmatpush1.msra.mxu0 0.0
    %363 = vmatprep.subr.mxu0 0.0
    %364 = vmatpush1.msra.mxu0 0.0
    %365 = vmatprep.subr.mxu0 0.0
    %366 = vmatpush1.msra.mxu0 0.0
    %367 = vmatprep.subr.mxu0 0.0
    %368 = vmatpush1.msra.mxu0 0.0
    %369 = vmatprep.subr.mxu0 0.0
    %370 = vmatpush1.msra.mxu0 0.0
    %371 = vmatprep.subr.mxu0 0.0
    %372 = vmatpush1.msra.mxu0 0.0
    %373 = vmatprep.subr.mxu0 0.0
    %374 = vmatpush1.msra.mxu0 0.0
    %375 = vmatprep.mubr.f32.mxu0 0.0
    %376 = vmatmul.mubr.f32.gmra.mrb[0].mxu0 %v303
    %v377 = vpop.f32.mrb[0].mxu0
    %v378 = vadd.f32 0.0, %v377
    %v379 = vpop.f32.mrb[0].mxu0
    %v380 = vadd.f32 0.0, %v379
    %381 = vdwg.mxu0
    %v382 = vadd.f32 %v291, %v378
    %v383 = vadd.f32 %v292, %v380
    %384 = vrot.lane.b32.xlu0 %v17, 1
    %v385 = vpop.permute.xlu0 %384
    %386 = vrot.lane.b32.xlu0 %v19, 1
    %v387 = vpop.permute.xlu0 %386
    %vm388 = vcmp.lt.s32.totalorder %v26, 1
    %v389 = vsel %vm388, %v385, %v387
    %v390 = vsel %vm388, %v387, %v385
    %s391 = scalar_lea.vmem %s1, 32
    %v392 = vld [vmem:[%s391] sm:$0xff]
    %v394 = vsel %vm40, %v392, 0
    %v397 = vsel %vm44, %v390, 0
    %v400 = vsel %vm44, %v389, 0
    %402 = vmatprep.subr.mxu0 %v400
    %403 = vmatpush1.msra.mxu0 %v397
    %404 = vmatprep.subr.mxu0 0.0
    %405 = vmatpush1.msra.mxu0 0.0
    %406 = vmatprep.subr.mxu0 0.0
    %407 = vmatpush1.msra.mxu0 0.0
    %408 = vmatprep.subr.mxu0 0.0
    %409 = vmatpush1.msra.mxu0 0.0
    %410 = vmatprep.subr.mxu0 0.0
    %411 = vmatpush1.msra.mxu0 0.0
    %412 = vmatprep.subr.mxu0 0.0
    %413 = vmatpush1.msra.mxu0 0.0
    %414 = vmatprep.subr.mxu0 0.0
    %415 = vmatpush1.msra.mxu0 0.0
    %416 = vmatprep.subr.mxu0 0.0
    %417 = vmatpush1.msra.mxu0 0.0
    %418 = vmatprep.subr.mxu0 0.0
    %419 = vmatpush1.msra.mxu0 0.0
    %420 = vmatprep.subr.mxu0 0.0
    %421 = vmatpush1.msra.mxu0 0.0
    %422 = vmatprep.subr.mxu0 0.0
    %423 = vmatpush1.msra.mxu0 0.0
    %424 = vmatprep.subr.mxu0 0.0
    %425 = vmatpush1.msra.mxu0 0.0
    %426 = vmatprep.subr.mxu0 0.0
    %427 = vmatpush1.msra.mxu0 0.0
    %428 = vmatprep.subr.mxu0 0.0
    %429 = vmatpush1.msra.mxu0 0.0
    %430 = vmatprep.subr.mxu0 0.0
    %431 = vmatpush1.msra.mxu0 0.0
    %432 = vmatprep.subr.mxu0 0.0
    %433 = vmatpush1.msra.mxu0 0.0
    %434 = vmatprep.subr.mxu0 0.0
    %435 = vmatpush1.msra.mxu0 0.0
    %436 = vmatprep.subr.mxu0 0.0
    %437 = vmatpush1.msra.mxu0 0.0
    %438 = vmatprep.subr.mxu0 0.0
    %439 = vmatpush1.msra.mxu0 0.0
    %440 = vmatprep.subr.mxu0 0.0
    %441 = vmatpush1.msra.mxu0 0.0
    %442 = vmatprep.subr.mxu0 0.0
    %443 = vmatpush1.msra.mxu0 0.0
    %444 = vmatprep.subr.mxu0 0.0
    %445 = vmatpush1.msra.mxu0 0.0
    %446 = vmatprep.subr.mxu0 0.0
    %447 = vmatpush1.msra.mxu0 0.0
    %448 = vmatprep.subr.mxu0 0.0
    %449 = vmatpush1.msra.mxu0 0.0
    %450 = vmatprep.subr.mxu0 0.0
    %451 = vmatpush1.msra.mxu0 0.0
    %452 = vmatprep.subr.mxu0 0.0
    %453 = vmatpush1.msra.mxu0 0.0
    %454 = vmatprep.subr.mxu0 0.0
    %455 = vmatpush1.msra.mxu0 0.0
    %456 = vmatprep.subr.mxu0 0.0
    %457 = vmatpush1.msra.mxu0 0.0
    %458 = vmatprep.subr.mxu0 0.0
    %459 = vmatpush1.msra.mxu0 0.0
    %460 = vmatprep.subr.mxu0 0.0
    %461 = vmatpush1.msra.mxu0 0.0
    %462 = vmatprep.subr.mxu0 0.0
    %463 = vmatpush1.msra.mxu0 0.0
    %464 = vmatprep.subr.mxu0 0.0
    %465 = vmatpush1.msra.mxu0 0.0
    %466 = vmatprep.mubr.f32.mxu0 0.0
    %467 = vmatmul.mubr.f32.gmra.mrb[0].mxu0 %v394
    %v468 = vpop.f32.mrb[0].mxu0
    %v469 = vadd.f32 0.0, %v468
    %v470 = vpop.f32.mrb[0].mxu0
    %v471 = vadd.f32 0.0, %v470
    %472 = vdwg.mxu0
    %v473 = vadd.f32 %v382, %v469
    %v474 = vadd.f32 %v383, %v471
    %s475 = scalar_lea.vmem %s1, 40
    %v476 = vld [vmem:[%s475] sm:$0xff]
    %v478 = vsel %vm40, %v476, 0
    %v480 = vsel %vm44, %v17, 0
    %v482 = vsel %vm44, %v19, 0
    %484 = vmatprep.subr.mxu0 %v482
    %485 = vmatpush1.msra.mxu0 %v480
    %486 = vmatprep.subr.mxu0 0.0
    %487 = vmatpush1.msra.mxu0 0.0
    %488 = vmatprep.subr.mxu0 0.0
    %489 = vmatpush1.msra.mxu0 0.0
    %490 = vmatprep.subr.mxu0 0.0
    %491 = vmatpush1.msra.mxu0 0.0
    %492 = vmatprep.subr.mxu0 0.0
    %493 = vmatpush1.msra.mxu0 0.0
    %494 = vmatprep.subr.mxu0 0.0
    %495 = vmatpush1.msra.mxu0 0.0
    %496 = vmatprep.subr.mxu0 0.0
    %497 = vmatpush1.msra.mxu0 0.0
    %498 = vmatprep.subr.mxu0 0.0
    %499 = vmatpush1.msra.mxu0 0.0
    %500 = vmatprep.subr.mxu0 0.0
    %501 = vmatpush1.msra.mxu0 0.0
    %502 = vmatprep.subr.mxu0 0.0
    %503 = vmatpush1.msra.mxu0 0.0
    %504 = vmatprep.subr.mxu0 0.0
    %505 = vmatpush1.msra.mxu0 0.0
    %506 = vmatprep.subr.mxu0 0.0
    %507 = vmatpush1.msra.mxu0 0.0
    %508 = vmatprep.subr.mxu0 0.0
    %509 = vmatpush1.msra.mxu0 0.0
    %510 = vmatprep.subr.mxu0 0.0
    %511 = vmatpush1.msra.mxu0 0.0
    %512 = vmatprep.subr.mxu0 0.0
    %513 = vmatpush1.msra.mxu0 0.0
    %514 = vmatprep.subr.mxu0 0.0
    %515 = vmatpush1.msra.mxu0 0.0
    %516 = vmatprep.subr.mxu0 0.0
    %517 = vmatpush1.msra.mxu0 0.0
    %518 = vmatprep.subr.mxu0 0.0
    %519 = vmatpush1.msra.mxu0 0.0
    %520 = vmatprep.subr.mxu0 0.0
    %521 = vmatpush1.msra.mxu0 0.0
    %522 = vmatprep.subr.mxu0 0.0
    %523 = vmatpush1.msra.mxu0 0.0
    %524 = vmatprep.subr.mxu0 0.0
    %525 = vmatpush1.msra.mxu0 0.0
    %526 = vmatprep.subr.mxu0 0.0
    %527 = vmatpush1.msra.mxu0 0.0
    %528 = vmatprep.subr.mxu0 0.0
    %529 = vmatpush1.msra.mxu0 0.0
    %530 = vmatprep.subr.mxu0 0.0
    %531 = vmatpush1.msra.mxu0 0.0
    %532 = vmatprep.subr.mxu0 0.0
    %533 = vmatpush1.msra.mxu0 0.0
    %534 = vmatprep.subr.mxu0 0.0
    %535 = vmatpush1.msra.mxu0 0.0
    %536 = vmatprep.subr.mxu0 0.0
    %537 = vmatpush1.msra.mxu0 0.0
    %538 = vmatprep.subr.mxu0 0.0
    %539 = vmatpush1.msra.mxu0 0.0
    %540 = vmatprep.subr.mxu0 0.0
    %541 = vmatpush1.msra.mxu0 0.0
    %542 = vmatprep.subr.mxu0 0.0
    %543 = vmatpush1.msra.mxu0 0.0
    %544 = vmatprep.subr.mxu0 0.0
    %545 = vmatpush1.msra.mxu0 0.0
    %546 = vmatprep.subr.mxu0 0.0
    %547 = vmatpush1.msra.mxu0 0.0
    %548 = vmatprep.mubr.f32.mxu0 0.0
    %549 = vmatmul.mubr.f32.gmra.mrb[0].mxu0 %v478
    %v550 = vpop.f32.mrb[0].mxu0
    %v551 = vadd.f32 0.0, %v550
    %v552 = vpop.f32.mrb[0].mxu0
    %v553 = vadd.f32 0.0, %v552
    %554 = vdwg.mxu0
    %v555 = vadd.f32 %v473, %v551
    %v556 = vadd.f32 %v474, %v553
    %557 = vrot.lane.b32.xlu0 %v17, 127
    %v558 = vpop.permute.xlu0 %557
    %559 = vrot.lane.b32.xlu0 %v19, 127
    %v560 = vpop.permute.xlu0 %559
    %vm561 = vcmp.lt.s32.totalorder %v26, 127
    %v562 = vsel %vm561, %v558, %v560
    %v563 = vsel %vm561, %v560, %v558
    %s564 = scalar_lea.vmem %s1, 48
    %v565 = vld [vmem:[%s564] sm:$0xff]
    %v567 = vsel %vm40, %v565, 0
    %v570 = vsel %vm44, %v562, 0
    %v573 = vsel %vm44, %v563, 0
    %575 = vmatprep.subr.mxu0 %v573
    %576 = vmatpush1.msra.mxu0 %v570
    %577 = vmatprep.subr.mxu0 0.0
    %578 = vmatpush1.msra.mxu0 0.0
    %579 = vmatprep.subr.mxu0 0.0
    %580 = vmatpush1.msra.mxu0 0.0
    %581 = vmatprep.subr.mxu0 0.0
    %582 = vmatpush1.msra.mxu0 0.0
    %583 = vmatprep.subr.mxu0 0.0
    %584 = vmatpush1.msra.mxu0 0.0
    %585 = vmatprep.subr.mxu0 0.0
    %586 = vmatpush1.msra.mxu0 0.0
    %587 = vmatprep.subr.mxu0 0.0
    %588 = vmatpush1.msra.mxu0 0.0
    %589 = vmatprep.subr.mxu0 0.0
    %590 = vmatpush1.msra.mxu0 0.0
    %591 = vmatprep.subr.mxu0 0.0
    %592 = vmatpush1.msra.mxu0 0.0
    %593 = vmatprep.subr.mxu0 0.0
    %594 = vmatpush1.msra.mxu0 0.0
    %595 = vmatprep.subr.mxu0 0.0
    %596 = vmatpush1.msra.mxu0 0.0
    %597 = vmatprep.subr.mxu0 0.0
    %598 = vmatpush1.msra.mxu0 0.0
    %599 = vmatprep.subr.mxu0 0.0
    %600 = vmatpush1.msra.mxu0 0.0
    %601 = vmatprep.subr.mxu0 0.0
    %602 = vmatpush1.msra.mxu0 0.0
    %603 = vmatprep.subr.mxu0 0.0
    %604 = vmatpush1.msra.mxu0 0.0
    %605 = vmatprep.subr.mxu0 0.0
    %606 = vmatpush1.msra.mxu0 0.0
    %607 = vmatprep.subr.mxu0 0.0
    %608 = vmatpush1.msra.mxu0 0.0
    %609 = vmatprep.subr.mxu0 0.0
    %610 = vmatpush1.msra.mxu0 0.0
    %611 = vmatprep.subr.mxu0 0.0
    %612 = vmatpush1.msra.mxu0 0.0
    %613 = vmatprep.subr.mxu0 0.0
    %614 = vmatpush1.msra.mxu0 0.0
    %615 = vmatprep.subr.mxu0 0.0
    %616 = vmatpush1.msra.mxu0 0.0
    %617 = vmatprep.subr.mxu0 0.0
    %618 = vmatpush1.msra.mxu0 0.0
    %619 = vmatprep.subr.mxu0 0.0
    %620 = vmatpush1.msra.mxu0 0.0
    %621 = vmatprep.subr.mxu0 0.0
    %622 = vmatpush1.msra.mxu0 0.0
    %623 = vmatprep.subr.mxu0 0.0
    %624 = vmatpush1.msra.mxu0 0.0
    %625 = vmatprep.subr.mxu0 0.0
    %626 = vmatpush1.msra.mxu0 0.0
    %627 = vmatprep.subr.mxu0 0.0
    %628 = vmatpush1.msra.mxu0 0.0
    %629 = vmatprep.subr.mxu0 0.0
    %630 = vmatpush1.msra.mxu0 0.0
    %631 = vmatprep.subr.mxu0 0.0
    %632 = vmatpush1.msra.mxu0 0.0
    %633 = vmatprep.subr.mxu0 0.0
    %634 = vmatpush1.msra.mxu0 0.0
    %635 = vmatprep.subr.mxu0 0.0
    %636 = vmatpush1.msra.mxu0 0.0
    %637 = vmatprep.subr.mxu0 0.0
    %638 = vmatpush1.msra.mxu0 0.0
    %639 = vmatprep.mubr.f32.mxu0 0.0
    %640 = vmatmul.mubr.f32.gmra.mrb[0].mxu0 %v567
    %v641 = vpop.f32.mrb[0].mxu0
    %v642 = vadd.f32 0.0, %v641
    %v643 = vpop.f32.mrb[0].mxu0
    %v644 = vadd.f32 0.0, %v643
    %645 = vdwg.mxu0
    %v646 = vadd.f32 %v555, %v642
    %v647 = vadd.f32 %v556, %v644
    %648 = vrot.lane.b32.xlu0 %v17, 126
    %v649 = vpop.permute.xlu0 %648
    %650 = vrot.lane.b32.xlu0 %v19, 126
    %v651 = vpop.permute.xlu0 %650
    %vm652 = vcmp.lt.s32.totalorder %v26, 126
    %v653 = vsel %vm652, %v649, %v651
    %v654 = vsel %vm652, %v651, %v649
    %s655 = scalar_lea.vmem %s1, 56
    %v656 = vld [vmem:[%s655] sm:$0xff]
    %v658 = vsel %vm40, %v656, 0
    %v661 = vsel %vm44, %v653, 0
    %v664 = vsel %vm44, %v654, 0
    %666 = vmatprep.subr.mxu0 %v664
    %667 = vmatpush1.msra.mxu0 %v661
    %668 = vmatprep.subr.mxu0 0.0
    %669 = vmatpush1.msra.mxu0 0.0
    %670 = vmatprep.subr.mxu0 0.0
    %671 = vmatpush1.msra.mxu0 0.0
    %672 = vmatprep.subr.mxu0 0.0
    %673 = vmatpush1.msra.mxu0 0.0
    %674 = vmatprep.subr.mxu0 0.0
    %675 = vmatpush1.msra.mxu0 0.0
    %676 = vmatprep.subr.mxu0 0.0
    %677 = vmatpush1.msra.mxu0 0.0
    %678 = vmatprep.subr.mxu0 0.0
    %679 = vmatpush1.msra.mxu0 0.0
    %680 = vmatprep.subr.mxu0 0.0
    %681 = vmatpush1.msra.mxu0 0.0
    %682 = vmatprep.subr.mxu0 0.0
    %683 = vmatpush1.msra.mxu0 0.0
    %684 = vmatprep.subr.mxu0 0.0
    %685 = vmatpush1.msra.mxu0 0.0
    %686 = vmatprep.subr.mxu0 0.0
    %687 = vmatpush1.msra.mxu0 0.0
    %688 = vmatprep.subr.mxu0 0.0
    %689 = vmatpush1.msra.mxu0 0.0
    %690 = vmatprep.subr.mxu0 0.0
    %691 = vmatpush1.msra.mxu0 0.0
    %692 = vmatprep.subr.mxu0 0.0
    %693 = vmatpush1.msra.mxu0 0.0
    %694 = vmatprep.subr.mxu0 0.0
    %695 = vmatpush1.msra.mxu0 0.0
    %696 = vmatprep.subr.mxu0 0.0
    %697 = vmatpush1.msra.mxu0 0.0
    %698 = vmatprep.subr.mxu0 0.0
    %699 = vmatpush1.msra.mxu0 0.0
    %700 = vmatprep.subr.mxu0 0.0
    %701 = vmatpush1.msra.mxu0 0.0
    %702 = vmatprep.subr.mxu0 0.0
    %703 = vmatpush1.msra.mxu0 0.0
    %704 = vmatprep.subr.mxu0 0.0
    %705 = vmatpush1.msra.mxu0 0.0
    %706 = vmatprep.subr.mxu0 0.0
    %707 = vmatpush1.msra.mxu0 0.0
    %708 = vmatprep.subr.mxu0 0.0
    %709 = vmatpush1.msra.mxu0 0.0
    %710 = vmatprep.subr.mxu0 0.0
    %711 = vmatpush1.msra.mxu0 0.0
    %712 = vmatprep.subr.mxu0 0.0
    %713 = vmatpush1.msra.mxu0 0.0
    %714 = vmatprep.subr.mxu0 0.0
    %715 = vmatpush1.msra.mxu0 0.0
    %716 = vmatprep.subr.mxu0 0.0
    %717 = vmatpush1.msra.mxu0 0.0
    %718 = vmatprep.subr.mxu0 0.0
    %719 = vmatpush1.msra.mxu0 0.0
    %720 = vmatprep.subr.mxu0 0.0
    %721 = vmatpush1.msra.mxu0 0.0
    %722 = vmatprep.subr.mxu0 0.0
    %723 = vmatpush1.msra.mxu0 0.0
    %724 = vmatprep.subr.mxu0 0.0
    %725 = vmatpush1.msra.mxu0 0.0
    %726 = vmatprep.subr.mxu0 0.0
    %727 = vmatpush1.msra.mxu0 0.0
    %728 = vmatprep.subr.mxu0 0.0
    %729 = vmatpush1.msra.mxu0 0.0
    %730 = vmatprep.mubr.f32.mxu0 0.0
    %731 = vmatmul.mubr.f32.gmra.mrb[0].mxu0 %v658
    %v732 = vpop.f32.mrb[0].mxu0
    %v733 = vadd.f32 0.0, %v732
    %v734 = vpop.f32.mrb[0].mxu0
    %v735 = vadd.f32 0.0, %v734
    %736 = vdwg.mxu0
    %v737 = vadd.f32 %v646, %v733
    %v738 = vadd.f32 %v647, %v735
    %739 = vrot.lane.b32.xlu0 %v17, 125
    %v740 = vpop.permute.xlu0 %739
    %741 = vrot.lane.b32.xlu0 %v19, 125
    %v742 = vpop.permute.xlu0 %741
    %vm743 = vcmp.lt.s32.totalorder %v26, 125
    %v744 = vsel %vm743, %v740, %v742
    %v745 = vsel %vm743, %v742, %v740
    %s746 = scalar_lea.vmem %s1, 64
    %v747 = vld [vmem:[%s746] sm:$0xff]
    %v749 = vsel %vm40, %v747, 0
    %v752 = vsel %vm44, %v744, 0
    %v755 = vsel %vm44, %v745, 0
    %757 = vmatprep.subr.mxu0 %v755
    %758 = vmatpush1.msra.mxu0 %v752
    %759 = vmatprep.subr.mxu0 0.0
    %760 = vmatpush1.msra.mxu0 0.0
    %761 = vmatprep.subr.mxu0 0.0
    %762 = vmatpush1.msra.mxu0 0.0
    %763 = vmatprep.subr.mxu0 0.0
    %764 = vmatpush1.msra.mxu0 0.0
    %765 = vmatprep.subr.mxu0 0.0
    %766 = vmatpush1.msra.mxu0 0.0
    %767 = vmatprep.subr.mxu0 0.0
    %768 = vmatpush1.msra.mxu0 0.0
    %769 = vmatprep.subr.mxu0 0.0
    %770 = vmatpush1.msra.mxu0 0.0
    %771 = vmatprep.subr.mxu0 0.0
    %772 = vmatpush1.msra.mxu0 0.0
    %773 = vmatprep.subr.mxu0 0.0
    %774 = vmatpush1.msra.mxu0 0.0
    %775 = vmatprep.subr.mxu0 0.0
    %776 = vmatpush1.msra.mxu0 0.0
    %777 = vmatprep.subr.mxu0 0.0
    %778 = vmatpush1.msra.mxu0 0.0
    %779 = vmatprep.subr.mxu0 0.0
    %780 = vmatpush1.msra.mxu0 0.0
    %781 = vmatprep.subr.mxu0 0.0
    %782 = vmatpush1.msra.mxu0 0.0
    %783 = vmatprep.subr.mxu0 0.0
    %784 = vmatpush1.msra.mxu0 0.0
    %785 = vmatprep.subr.mxu0 0.0
    %786 = vmatpush1.msra.mxu0 0.0
    %787 = vmatprep.subr.mxu0 0.0
    %788 = vmatpush1.msra.mxu0 0.0
    %789 = vmatprep.subr.mxu0 0.0
    %790 = vmatpush1.msra.mxu0 0.0
    %791 = vmatprep.subr.mxu0 0.0
    %792 = vmatpush1.msra.mxu0 0.0
    %793 = vmatprep.subr.mxu0 0.0
    %794 = vmatpush1.msra.mxu0 0.0
    %795 = vmatprep.subr.mxu0 0.0
    %796 = vmatpush1.msra.mxu0 0.0
    %797 = vmatprep.subr.mxu0 0.0
    %798 = vmatpush1.msra.mxu0 0.0
    %799 = vmatprep.subr.mxu0 0.0
    %800 = vmatpush1.msra.mxu0 0.0
    %801 = vmatprep.subr.mxu0 0.0
    %802 = vmatpush1.msra.mxu0 0.0
    %803 = vmatprep.subr.mxu0 0.0
    %804 = vmatpush1.msra.mxu0 0.0
    %805 = vmatprep.subr.mxu0 0.0
    %806 = vmatpush1.msra.mxu0 0.0
    %807 = vmatprep.subr.mxu0 0.0
    %808 = vmatpush1.msra.mxu0 0.0
    %809 = vmatprep.subr.mxu0 0.0
    %810 = vmatpush1.msra.mxu0 0.0
    %811 = vmatprep.subr.mxu0 0.0
    %812 = vmatpush1.msra.mxu0 0.0
    %813 = vmatprep.subr.mxu0 0.0
    %814 = vmatpush1.msra.mxu0 0.0
    %815 = vmatprep.subr.mxu0 0.0
    %816 = vmatpush1.msra.mxu0 0.0
    %817 = vmatprep.subr.mxu0 0.0
    %818 = vmatpush1.msra.mxu0 0.0
    %819 = vmatprep.subr.mxu0 0.0
    %820 = vmatpush1.msra.mxu0 0.0
    %821 = vmatprep.mubr.f32.mxu0 0.0
    %822 = vmatmul.mubr.f32.gmra.mrb[0].mxu0 %v749
    %v823 = vpop.f32.mrb[0].mxu0
    %v824 = vadd.f32 0.0, %v823
    %v825 = vpop.f32.mrb[0].mxu0
    %v826 = vadd.f32 0.0, %v825
    %827 = vdwg.mxu0
    %v828 = vadd.f32 %v737, %v824
    %v829 = vadd.f32 %v738, %v826
    %830 = vrot.lane.b32.xlu0 %v17, 124
    %v831 = vpop.permute.xlu0 %830
    %832 = vrot.lane.b32.xlu0 %v19, 124
    %v833 = vpop.permute.xlu0 %832
    %vm834 = vcmp.lt.s32.totalorder %v26, 124
    %v835 = vsel %vm834, %v831, %v833
    %v836 = vsel %vm834, %v833, %v831
    %s837 = scalar_lea.vmem %s1, 72
    %v838 = vld [vmem:[%s837] sm:$0xff]
    %v840 = vsel %vm40, %v838, 0
    %v843 = vsel %vm44, %v835, 0
    %v846 = vsel %vm44, %v836, 0
    %848 = vmatprep.subr.mxu0 %v846
    %849 = vmatpush1.msra.mxu0 %v843
    %850 = vmatprep.subr.mxu0 0.0
    %851 = vmatpush1.msra.mxu0 0.0
    %852 = vmatprep.subr.mxu0 0.0
    %853 = vmatpush1.msra.mxu0 0.0
    %854 = vmatprep.subr.mxu0 0.0
    %855 = vmatpush1.msra.mxu0 0.0
    %856 = vmatprep.subr.mxu0 0.0
    %857 = vmatpush1.msra.mxu0 0.0
    %858 = vmatprep.subr.mxu0 0.0
    %859 = vmatpush1.msra.mxu0 0.0
    %860 = vmatprep.subr.mxu0 0.0
    %861 = vmatpush1.msra.mxu0 0.0
    %862 = vmatprep.subr.mxu0 0.0
    %863 = vmatpush1.msra.mxu0 0.0
    %864 = vmatprep.subr.mxu0 0.0
    %865 = vmatpush1.msra.mxu0 0.0
    %866 = vmatprep.subr.mxu0 0.0
    %867 = vmatpush1.msra.mxu0 0.0
    %868 = vmatprep.subr.mxu0 0.0
    %869 = vmatpush1.msra.mxu0 0.0
    %870 = vmatprep.subr.mxu0 0.0
    %871 = vmatpush1.msra.mxu0 0.0
    %872 = vmatprep.subr.mxu0 0.0
    %873 = vmatpush1.msra.mxu0 0.0
    %874 = vmatprep.subr.mxu0 0.0
    %875 = vmatpush1.msra.mxu0 0.0
    %876 = vmatprep.subr.mxu0 0.0
    %877 = vmatpush1.msra.mxu0 0.0
    %878 = vmatprep.subr.mxu0 0.0
    %879 = vmatpush1.msra.mxu0 0.0
    %880 = vmatprep.subr.mxu0 0.0
    %881 = vmatpush1.msra.mxu0 0.0
    %882 = vmatprep.subr.mxu0 0.0
    %883 = vmatpush1.msra.mxu0 0.0
    %884 = vmatprep.subr.mxu0 0.0
    %885 = vmatpush1.msra.mxu0 0.0
    %886 = vmatprep.subr.mxu0 0.0
    %887 = vmatpush1.msra.mxu0 0.0
    %888 = vmatprep.subr.mxu0 0.0
    %889 = vmatpush1.msra.mxu0 0.0
    %890 = vmatprep.subr.mxu0 0.0
    %891 = vmatpush1.msra.mxu0 0.0
    %892 = vmatprep.subr.mxu0 0.0
    %893 = vmatpush1.msra.mxu0 0.0
    %894 = vmatprep.subr.mxu0 0.0
    %895 = vmatpush1.msra.mxu0 0.0
    %896 = vmatprep.subr.mxu0 0.0
    %897 = vmatpush1.msra.mxu0 0.0
    %898 = vmatprep.subr.mxu0 0.0
    %899 = vmatpush1.msra.mxu0 0.0
    %900 = vmatprep.subr.mxu0 0.0
    %901 = vmatpush1.msra.mxu0 0.0
    %902 = vmatprep.subr.mxu0 0.0
    %903 = vmatpush1.msra.mxu0 0.0
    %904 = vmatprep.subr.mxu0 0.0
    %905 = vmatpush1.msra.mxu0 0.0
    %906 = vmatprep.subr.mxu0 0.0
    %907 = vmatpush1.msra.mxu0 0.0
    %908 = vmatprep.subr.mxu0 0.0
    %909 = vmatpush1.msra.mxu0 0.0
    %910 = vmatprep.subr.mxu0 0.0
    %911 = vmatpush1.msra.mxu0 0.0
    %912 = vmatprep.mubr.f32.mxu0 0.0
    %913 = vmatmul.mubr.f32.gmra.mrb[0].mxu0 %v840
    %v914 = vpop.f32.mrb[0].mxu0
    %v915 = vadd.f32 0.0, %v914
    %v916 = vpop.f32.mrb[0].mxu0
    %v917 = vadd.f32 0.0, %v916
    %918 = vdwg.mxu0
    %v919 = vadd.f32 %v828, %v915
    %v920 = vadd.f32 %v829, %v917
    %921 = vrot.lane.b32.xlu0 %v17, 123
    %v922 = vpop.permute.xlu0 %921
    %923 = vrot.lane.b32.xlu0 %v19, 123
    %v924 = vpop.permute.xlu0 %923
    %vm925 = vcmp.lt.s32.totalorder %v26, 123
    %v926 = vsel %vm925, %v922, %v924
    %v927 = vsel %vm925, %v924, %v922
    %s928 = scalar_lea.vmem %s1, 80
    %v929 = vld [vmem:[%s928] sm:$0xff]
    %v931 = vsel %vm40, %v929, 0
    %v934 = vsel %vm44, %v926, 0
    %v937 = vsel %vm44, %v927, 0
    %939 = vmatprep.subr.mxu0 %v937
    %940 = vmatpush1.msra.mxu0 %v934
    %941 = vmatprep.subr.mxu0 0.0
    %942 = vmatpush1.msra.mxu0 0.0
    %943 = vmatprep.subr.mxu0 0.0
    %944 = vmatpush1.msra.mxu0 0.0
    %945 = vmatprep.subr.mxu0 0.0
    %946 = vmatpush1.msra.mxu0 0.0
    %947 = vmatprep.subr.mxu0 0.0
    %948 = vmatpush1.msra.mxu0 0.0
    %949 = vmatprep.subr.mxu0 0.0
    %950 = vmatpush1.msra.mxu0 0.0
    %951 = vmatprep.subr.mxu0 0.0
    %952 = vmatpush1.msra.mxu0 0.0
    %953 = vmatprep.subr.mxu0 0.0
    %954 = vmatpush1.msra.mxu0 0.0
    %955 = vmatprep.subr.mxu0 0.0
    %956 = vmatpush1.msra.mxu0 0.0
    %957 = vmatprep.subr.mxu0 0.0
    %958 = vmatpush1.msra.mxu0 0.0
    %959 = vmatprep.subr.mxu0 0.0
    %960 = vmatpush1.msra.mxu0 0.0
    %961 = vmatprep.subr.mxu0 0.0
    %962 = vmatpush1.msra.mxu0 0.0
    %963 = vmatprep.subr.mxu0 0.0
    %964 = vmatpush1.msra.mxu0 0.0
    %965 = vmatprep.subr.mxu0 0.0
    %966 = vmatpush1.msra.mxu0 0.0
    %967 = vmatprep.subr.mxu0 0.0
    %968 = vmatpush1.msra.mxu0 0.0
    %969 = vmatprep.subr.mxu0 0.0
    %970 = vmatpush1.msra.mxu0 0.0
    %971 = vmatprep.subr.mxu0 0.0
    %972 = vmatpush1.msra.mxu0 0.0
    %973 = vmatprep.subr.mxu0 0.0
    %974 = vmatpush1.msra.mxu0 0.0
    %975 = vmatprep.subr.mxu0 0.0
    %976 = vmatpush1.msra.mxu0 0.0
    %977 = vmatprep.subr.mxu0 0.0
    %978 = vmatpush1.msra.mxu0 0.0
    %979 = vmatprep.subr.mxu0 0.0
    %980 = vmatpush1.msra.mxu0 0.0
    %981 = vmatprep.subr.mxu0 0.0
    %982 = vmatpush1.msra.mxu0 0.0
    %983 = vmatprep.subr.mxu0 0.0
    %984 = vmatpush1.msra.mxu0 0.0
    %985 = vmatprep.subr.mxu0 0.0
    %986 = vmatpush1.msra.mxu0 0.0
    %987 = vmatprep.subr.mxu0 0.0
    %988 = vmatpush1.msra.mxu0 0.0
    %989 = vmatprep.subr.mxu0 0.0
    %990 = vmatpush1.msra.mxu0 0.0
    %991 = vmatprep.subr.mxu0 0.0
    %992 = vmatpush1.msra.mxu0 0.0
    %993 = vmatprep.subr.mxu0 0.0
    %994 = vmatpush1.msra.mxu0 0.0
    %995 = vmatprep.subr.mxu0 0.0
    %996 = vmatpush1.msra.mxu0 0.0
    %997 = vmatprep.subr.mxu0 0.0
    %998 = vmatpush1.msra.mxu0 0.0
    %999 = vmatprep.subr.mxu0 0.0
    %1000 = vmatpush1.msra.mxu0 0.0
    %1001 = vmatprep.subr.mxu0 0.0
    %1002 = vmatpush1.msra.mxu0 0.0
    %1003 = vmatprep.mubr.f32.mxu0 0.0
    %1004 = vmatmul.mubr.f32.gmra.mrb[0].mxu0 %v931
    %v1005 = vpop.f32.mrb[0].mxu0
    %v1006 = vadd.f32 0.0, %v1005
    %v1007 = vpop.f32.mrb[0].mxu0
    %v1008 = vadd.f32 0.0, %v1007
    %1009 = vdwg.mxu0
    %v1010 = vadd.f32 %v919, %v1006
    %v1011 = vadd.f32 %v920, %v1008
    %v1012 = vld [vmem:[%s2] sm:$0x3]
    %v1014 = vlaneseq
    %v1015 = vshrl.u32 %v1014, 7
    %v1016 = vsub.s32 0, %v1015
    %v1017 = vrot.slane %v1012, %v1016
    %v1018 = vlaneseq
    %v1019 = vshrl.u32 %v1018, 7
    %v1020 = vsub.s32 1, %v1019
    %v1021 = vrot.slane %v1012, %v1020
    %v1024 = vmul.f32 %v1010, %v1017
    %v1025 = vmul.f32 %v1011, %v1021
    %1026 = vst [vmem:[#allocation2] sm:$0xff] %v1024
    %1027 = vst [vmem:[#allocation2 + $0x8] sm:$0xff] %v1025
    %v1028 = vadd.f32 %v1024, %v1025
    %1029 = vadd.xlane.f32.xlu0 %v1028
    %v1030 = vpop.xlane.xlu0 %1029
    %v1031 = vmul.f32 %v1024, %v1024
    %v1032 = vmul.f32 %v1025, %v1025
    %v1033 = vadd.f32 %v1031, %v1032
    %1034 = vadd.xlane.f32.xlu0 %v1033
    %v1035 = vpop.xlane.xlu0 %1034
    %vm1036 = vcmask 7168
    %v1037 = vsel %vm1036, %v1030, %v1035
    %vm1038 = vcmask 15360
    %1039 = vst.msk [vmem:[%s4] sm:$0xff] %vm1038, %v1037
    // Predicated region
    $region14: #{tpu_custom_call.1} parent=1 // pred_check
      _
    $region15: #{tpu_custom_call.1} parent=1 // pred_check_branch
      %1041 = sbr.rel (0) target = $region17
    $region16: #{tpu_custom_call.1} parent=1 // pred_region
      %s1043 = ssub.s32 256, 256
      %1044 = vsyncadd [#allocation3], %s1043
      %s1046 = sshll.u32 [#allocation2], 4
      %s1047 = int_to_ptr.vmem [resolvable:$true] %s1046
      %1049 = dma.vmem_to_hbm [thread:$0]  %s1047, 256, %s3, [#allocation3]
    $region17: #{tpu_custom_call.1} parent=1 // pred_fallthru
      _
    // Predicated region
    $region18: #{tpu_custom_call.1} parent=1 // pred_check
      _
    $region19: #{tpu_custom_call.1} parent=1 // pred_check_branch
      %1051 = sbr.rel (0) target = $region21
    $region20: #{tpu_custom_call.1} parent=1 // pred_region
      _
    $region21: #{tpu_custom_call.1} parent=1 // pred_fallthru
      _
    // Predicated region
    $region22: #{tpu_custom_call.1} parent=1 // pred_check
      _
    $region23: #{tpu_custom_call.1} parent=1 // pred_check_branch
      %1053 = sbr.rel (0) target = $region25
    $region24: #{tpu_custom_call.1} parent=1 // pred_region
      %1054 = dma.done [#allocation3], 256
    $region25: #{tpu_custom_call.1} parent=1 // pred_fallthru
      _
    // Predicated region
    $region26: #{tpu_custom_call.1} parent=1 // pred_check
      _
    $region27: #{tpu_custom_call.1} parent=1 // pred_check_branch
      %1056 = sbr.rel (0) target = $region29
    $region28: #{tpu_custom_call.1} parent=1 // pred_region
      _
    $region29: #{tpu_custom_call.1} parent=1 // pred_fallthru
      _
    %1057 = vsyncpa [#allocation3], 1

</llo_original>
